<compile_context>
chip_gen: v7x
topology: tpu7x:2x2x1
jax: 0.10.0
libtpu: 0.0.40
codegen_flags: <defaults>
</compile_context>

<pallas_src>
import jax
import jax.numpy as jnp
from jax.experimental import pallas as pl
from jax.experimental.pallas import tpu as pltpu


def _leaky_relu(x, slope=0.2):
    return jnp.where(x > 0, x, slope * x)


def encoder_kernel(x_ref, c_ref,
                   w1x_ref, w1c_ref, b1_ref,
                   w3_ref, b3_ref,
                   wh_ref, bh_ref,
                   out_ref):
    bf16 = jnp.bfloat16
    f32 = jnp.float32

    # fc1: the PyTorch concat([x, c]) @ W1 is computed as x @ W1x + c @ W1c (same math,
    # no materialized concat in HBM), then bias + LeakyReLU(0.2) in f32.
    h = (jnp.dot(x_ref[...].astype(bf16), w1x_ref[...], preferred_element_type=f32)
         + jnp.dot(c_ref[...].astype(bf16), w1c_ref[...], preferred_element_type=f32)
         + b1_ref[...])
    h = _leaky_relu(h)

    # fc3 + LeakyReLU(0.2)
    h = jnp.dot(h.astype(bf16), w3_ref[...], preferred_element_type=f32) + b3_ref[...]
    h = _leaky_relu(h)

    # fused heads: one matmul producing [means | log_vars] as a single lane-denser slab
    out = jnp.dot(h.astype(bf16), wh_ref[...], preferred_element_type=f32) + bh_ref[...]
    out_ref[...] = out.astype(out_ref.dtype)


def encoder_forward(x, c, params, *, encoder_use_y=True, batch_tile=512):
    """Encoder forward. x: [B, F] f32, c: [B, latent] f32 (or None if not encoder_use_y).

    Returns (means, log_vars), each [B, latent] f32.
    """
    B = x.shape[0]
    x_dim = x.shape[1]
    hidden = params["w1x"].shape[1]
    latent2 = params["wh"].shape[1]
    latent = latent2 // 2

    if encoder_use_y:
        assert c is not None, "encoder_use_y=True requires c"
        w1c = params["w1c"]
    else:
        # No concat in this configuration: feed a zero c / zero w1c (adds exactly 0).
        c = jnp.zeros((B, 1), x.dtype)
        w1c = jnp.zeros((1, hidden), params["w1x"].dtype)
    c_dim = c.shape[1]

    # Batch tile: full batch if small, else 512-row tiles (multiple of 8 sublanes);
    # the last (possibly partial) tile is handled by Pallas block padding + masked write.
    tb = B if B <= batch_tile else batch_tile
    grid = (pl.cdiv(B, tb),)

    def act_spec(cols):
        return pl.BlockSpec((tb, cols), lambda i: (i, 0))

    def resident_spec(shape):
        return pl.BlockSpec(shape, lambda i: (0, 0))

    slab = pl.pallas_call(
        encoder_kernel,
        out_shape=jax.ShapeDtypeStruct((B, latent2), jnp.float32),
        grid=grid,
        in_specs=[
            act_spec(x_dim),                          # x
            act_spec(c_dim),                          # c
            resident_spec((x_dim, hidden)),           # w1x
            resident_spec((c_dim, hidden)),           # w1c
            resident_spec((1, hidden)),               # b1
            resident_spec((hidden, latent2)),         # w3
            resident_spec((1, latent2)),              # b3
            resident_spec((latent2, latent2)),        # wh = [wm | wv]
            resident_spec((1, latent2)),              # bh = [bm | bv]
        ],
        out_specs=pl.BlockSpec((tb, latent2), lambda i: (i, 0)),
        compiler_params=pltpu.CompilerParams(
            dimension_semantics=("parallel",)),       # megacore sharding on v7x
    )(x, c, params["w1x"], w1c, params["b1"],
      params["w3"], params["b3"], params["wh"], params["bh"])

    return slab[:, :latent], slab[:, latent:]


def init_params(key, x_dim, c_dim, hidden_dim, latent_size, weight_dtype=jnp.bfloat16):
    """weights_init: Linear.weight ~ N(0, 0.02), bias = 0. Weights stored bf16, biases f32."""
    std = 0.02
    k1x, k1c, k3, km, kv = jax.random.split(key, 5)

    def w(k, shape):
        return (std * jax.random.normal(k, shape, jnp.float32)).astype(weight_dtype)

    wm = w(km, (2 * latent_size, latent_size))
    wv = w(kv, (2 * latent_size, latent_size))
    return {
        "w1x": w(k1x, (x_dim, hidden_dim)),
        "w1c": w(k1c, (c_dim, hidden_dim)),
        "b1": jnp.zeros((1, hidden_dim), jnp.float32),
        "w3": w(k3, (hidden_dim, 2 * latent_size)),
        "b3": jnp.zeros((1, 2 * latent_size), jnp.float32),
        "wh": jnp.concatenate([wm, wv], axis=1),       # fused heads weight [2L, 2L]
        "bh": jnp.zeros((1, 2 * latent_size), jnp.float32),
    }


def reference_forward(x, c, params, *, encoder_use_y=True):
    """Pure-JAX reference using the same bf16-weight / f32-accumulate math."""
    bf16, f32 = jnp.bfloat16, jnp.float32
    latent = params["wh"].shape[1] // 2
    h = jnp.dot(x.astype(bf16), params["w1x"], preferred_element_type=f32) + params["b1"]
    if encoder_use_y:
        h = h + jnp.dot(c.astype(bf16), params["w1c"], preferred_element_type=f32)
    h = _leaky_relu(h)
    h = jnp.dot(h.astype(bf16), params["w3"], preferred_element_type=f32) + params["b3"]
    h = _leaky_relu(h)
    out = jnp.dot(h.astype(bf16), params["wh"], preferred_element_type=f32) + params["bh"]
    return out[:, :latent], out[:, latent:]


if __name__ == "__main__":
    # Shapes consistent with the module:
    #   encoder_layer_sizes = [32, 64], latent_size = 16, opt.encoder_use_y = True
    batch = 8
    feat = 32
    latent_size = 16
    hidden = 64
    encoder_use_y = True

    key = jax.random.PRNGKey(0)
    kx, kc, kp = jax.random.split(key, 3)
    x = jax.random.normal(kx, (batch, feat), jnp.float32)
    c = jax.random.normal(kc, (batch, latent_size), jnp.float32)
    params = init_params(kp, feat, latent_size, hidden, latent_size)

    means, log_vars = encoder_forward(x, c, params, encoder_use_y=encoder_use_y)
    means = jax.block_until_ready(means)
    log_vars = jax.block_until_ready(log_vars)

    # sanity check against pure-JAX reference (same bf16 weights, f32 accumulation)
    m_ref, lv_ref = reference_forward(x, c, params, encoder_use_y=encoder_use_y)
    assert means.shape == (batch, latent_size)
    assert log_vars.shape == (batch, latent_size)
    assert jnp.allclose(means, m_ref, atol=1e-4, rtol=1e-2), "means mismatch"
    assert jnp.allclose(log_vars, lv_ref, atol=1e-4, rtol=1e-2), "log_vars mismatch"

    print("KERNEL_OK")
</pallas_src>

<mosaic_0001>
module attributes {stable_mosaic.version = 11 : i64} {
  func.func @encoder_kernel(%arg0: i32, %arg1: memref<8x32xf32, #tpu.memory_space<vmem>>, %arg2: memref<8x16xf32, #tpu.memory_space<vmem>>, %arg3: memref<32x64xbf16, #tpu.memory_space<vmem>>, %arg4: memref<16x64xbf16, #tpu.memory_space<vmem>>, %arg5: memref<1x64xf32, #tpu.memory_space<vmem>>, %arg6: memref<64x32xbf16, #tpu.memory_space<vmem>>, %arg7: memref<1x32xf32, #tpu.memory_space<vmem>>, %arg8: memref<32x32xbf16, #tpu.memory_space<vmem>>, %arg9: memref<1x32xf32, #tpu.memory_space<vmem>>, %arg10: memref<8x32xf32, #tpu.memory_space<vmem>>) attributes {dimension_semantics = [#tpu.dimension_semantics<parallel>], iteration_bounds = array<i64: 1>, scalar_prefetch = 0 : i64, scratch_operands = 0 : i64, tpu.core_type = #tpu.core_type<tc>, window_params = [{transform_indices = @transform_0, window_bounds = array<i64: 8, 32>}, {transform_indices = @transform_1, window_bounds = array<i64: 8, 16>}, {pipeline_mode = #tpu.pipeline_mode<synchronous>, transform_indices = @transform_2, window_bounds = array<i64: 32, 64>}, {pipeline_mode = #tpu.pipeline_mode<synchronous>, transform_indices = @transform_3, window_bounds = array<i64: 16, 64>}, {pipeline_mode = #tpu.pipeline_mode<synchronous>, transform_indices = @transform_4, window_bounds = array<i64: 1, 64>}, {pipeline_mode = #tpu.pipeline_mode<synchronous>, transform_indices = @transform_5, window_bounds = array<i64: 64, 32>}, {pipeline_mode = #tpu.pipeline_mode<synchronous>, transform_indices = @transform_6, window_bounds = array<i64: 1, 32>}, {pipeline_mode = #tpu.pipeline_mode<synchronous>, transform_indices = @transform_7, window_bounds = array<i64: 32, 32>}, {pipeline_mode = #tpu.pipeline_mode<synchronous>, transform_indices = @transform_8, window_bounds = array<i64: 1, 32>}, {transform_indices = @transform_9, window_bounds = array<i64: 8, 32>}]} {
    %c0 = arith.constant 0 : index
    %c0_0 = arith.constant 0 : index
    %0 = vector.load %arg1[%c0, %c0_0] : memref<8x32xf32, #tpu.memory_space<vmem>>, vector<8x32xf32>
    %1 = arith.truncf %0 : vector<8x32xf32> to vector<8x32xbf16>
    %c0_1 = arith.constant 0 : index
    %c0_2 = arith.constant 0 : index
    %2 = vector.load %arg3[%c0_1, %c0_2] : memref<32x64xbf16, #tpu.memory_space<vmem>>, vector<32x64xbf16>
    %cst = arith.constant dense<0.000000e+00> : vector<8x64xf32>
    %3 = tpu.matmul %1, %2, %cst {dimension_numbers = #tpu.dot_dimension_numbers<[1], [0], [0], [1], [0, 0, 1, 1], [], []>} : vector<8x32xbf16>, vector<32x64xbf16>, vector<8x64xf32> -> vector<8x64xf32>
    %c0_3 = arith.constant 0 : index
    %c0_4 = arith.constant 0 : index
    %4 = vector.load %arg2[%c0_3, %c0_4] : memref<8x16xf32, #tpu.memory_space<vmem>>, vector<8x16xf32>
    %5 = arith.truncf %4 : vector<8x16xf32> to vector<8x16xbf16>
    %c0_5 = arith.constant 0 : index
    %c0_6 = arith.constant 0 : index
    %6 = vector.load %arg4[%c0_5, %c0_6] : memref<16x64xbf16, #tpu.memory_space<vmem>>, vector<16x64xbf16>
    %cst_7 = arith.constant dense<0.000000e+00> : vector<8x64xf32>
    %7 = tpu.matmul %5, %6, %cst_7 {dimension_numbers = #tpu.dot_dimension_numbers<[1], [0], [0], [1], [0, 0, 1, 1], [], []>} : vector<8x16xbf16>, vector<16x64xbf16>, vector<8x64xf32> -> vector<8x64xf32>
    %8 = arith.addf %3, %7 : vector<8x64xf32>
    %c0_8 = arith.constant 0 : index
    %c0_9 = arith.constant 0 : index
    %9 = vector.load %arg5[%c0_8, %c0_9] : memref<1x64xf32, #tpu.memory_space<vmem>>, vector<1x64xf32>
    %10 = vector.broadcast %9 : vector<1x64xf32> to vector<8x64xf32>
    %11 = arith.addf %8, %10 : vector<8x64xf32>
    %cst_10 = arith.constant 0.000000e+00 : f32
    %12 = vector.broadcast %cst_10 : f32 to vector<8x64xf32>
    %13 = arith.cmpf ogt, %11, %12 : vector<8x64xf32>
    %cst_11 = arith.constant 2.000000e-01 : f32
    %14 = vector.broadcast %cst_11 : f32 to vector<8x64xf32>
    %15 = arith.mulf %14, %11 : vector<8x64xf32>
    %16 = arith.select %13, %11, %15 : vector<8x64xi1>, vector<8x64xf32>
    %17 = arith.truncf %16 : vector<8x64xf32> to vector<8x64xbf16>
    %c0_12 = arith.constant 0 : index
    %c0_13 = arith.constant 0 : index
    %18 = vector.load %arg6[%c0_12, %c0_13] : memref<64x32xbf16, #tpu.memory_space<vmem>>, vector<64x32xbf16>
    %cst_14 = arith.constant dense<0.000000e+00> : vector<8x32xf32>
    %19 = tpu.matmul %17, %18, %cst_14 {dimension_numbers = #tpu.dot_dimension_numbers<[1], [0], [0], [1], [0, 0, 1, 1], [], []>} : vector<8x64xbf16>, vector<64x32xbf16>, vector<8x32xf32> -> vector<8x32xf32>
    %c0_15 = arith.constant 0 : index
    %c0_16 = arith.constant 0 : index
    %20 = vector.load %arg7[%c0_15, %c0_16] : memref<1x32xf32, #tpu.memory_space<vmem>>, vector<1x32xf32>
    %21 = vector.broadcast %20 : vector<1x32xf32> to vector<8x32xf32>
    %22 = arith.addf %19, %21 : vector<8x32xf32>
    %cst_17 = arith.constant 0.000000e+00 : f32
    %23 = vector.broadcast %cst_17 : f32 to vector<8x32xf32>
    %24 = arith.cmpf ogt, %22, %23 : vector<8x32xf32>
    %cst_18 = arith.constant 2.000000e-01 : f32
    %25 = vector.broadcast %cst_18 : f32 to vector<8x32xf32>
    %26 = arith.mulf %25, %22 : vector<8x32xf32>
    %27 = arith.select %24, %22, %26 : vector<8x32xi1>, vector<8x32xf32>
    %28 = arith.truncf %27 : vector<8x32xf32> to vector<8x32xbf16>
    %c0_19 = arith.constant 0 : index
    %c0_20 = arith.constant 0 : index
    %29 = vector.load %arg8[%c0_19, %c0_20] : memref<32x32xbf16, #tpu.memory_space<vmem>>, vector<32x32xbf16>
    %cst_21 = arith.constant dense<0.000000e+00> : vector<8x32xf32>
    %30 = tpu.matmul %28, %29, %cst_21 {dimension_numbers = #tpu.dot_dimension_numbers<[1], [0], [0], [1], [0, 0, 1, 1], [], []>} : vector<8x32xbf16>, vector<32x32xbf16>, vector<8x32xf32> -> vector<8x32xf32>
    %c0_22 = arith.constant 0 : index
    %c0_23 = arith.constant 0 : index
    %31 = vector.load %arg9[%c0_22, %c0_23] : memref<1x32xf32, #tpu.memory_space<vmem>>, vector<1x32xf32>
    %32 = vector.broadcast %31 : vector<1x32xf32> to vector<8x32xf32>
    %33 = arith.addf %30, %32 : vector<8x32xf32>
    %c0_24 = arith.constant 0 : index
    %c0_25 = arith.constant 0 : index
    %34 = vector.load %arg10[%c0_24, %c0_25] : memref<8x32xf32, #tpu.memory_space<vmem>>, vector<8x32xf32>
    tpu.vector_store %arg10[%c0_24, %c0_25], %33 {strides = array<i32>} : memref<8x32xf32, #tpu.memory_space<vmem>>, vector<8x32xf32>,
    return
  }
  func.func @transform_0(%arg0: i32) -> (i32, i32) {
    %c0_i32 = arith.constant 0 : i32
    %c0_i32_0 = arith.constant 0 : i32
    return %arg0, %c0_i32 : i32, i32
  }
  func.func @transform_1(%arg0: i32) -> (i32, i32) {
    %c0_i32 = arith.constant 0 : i32
    %c0_i32_0 = arith.constant 0 : i32
    return %arg0, %c0_i32 : i32, i32
  }
  func.func @transform_2(%arg0: i32) -> (i32, i32) {
    %c0_i32 = arith.constant 0 : i32
    %c0_i32_0 = arith.constant 0 : i32
    %c0_i32_1 = arith.constant 0 : i32
    return %c0_i32, %c0_i32_0 : i32, i32
  }
  func.func @transform_3(%arg0: i32) -> (i32, i32) {
    %c0_i32 = arith.constant 0 : i32
    %c0_i32_0 = arith.constant 0 : i32
    %c0_i32_1 = arith.constant 0 : i32
    return %c0_i32, %c0_i32_0 : i32, i32
  }
  func.func @transform_4(%arg0: i32) -> (i32, i32) {
    %c0_i32 = arith.constant 0 : i32
    %c0_i32_0 = arith.constant 0 : i32
    %c0_i32_1 = arith.constant 0 : i32
    return %c0_i32, %c0_i32_0 : i32, i32
  }
  func.func @transform_5(%arg0: i32) -> (i32, i32) {
    %c0_i32 = arith.constant 0 : i32
    %c0_i32_0 = arith.constant 0 : i32
    %c0_i32_1 = arith.constant 0 : i32
    return %c0_i32, %c0_i32_0 : i32, i32
  }
  func.func @transform_6(%arg0: i32) -> (i32, i32) {
    %c0_i32 = arith.constant 0 : i32
    %c0_i32_0 = arith.constant 0 : i32
    %c0_i32_1 = arith.constant 0 : i32
    return %c0_i32, %c0_i32_0 : i32, i32
  }
  func.func @transform_7(%arg0: i32) -> (i32, i32) {
    %c0_i32 = arith.constant 0 : i32
    %c0_i32_0 = arith.constant 0 : i32
    %c0_i32_1 = arith.constant 0 : i32
    return %c0_i32, %c0_i32_0 : i32, i32
  }
  func.func @transform_8(%arg0: i32) -> (i32, i32) {
    %c0_i32 = arith.constant 0 : i32
    %c0_i32_0 = arith.constant 0 : i32
    %c0_i32_1 = arith.constant 0 : i32
    return %c0_i32, %c0_i32_0 : i32, i32
  }
  func.func @transform_9(%arg0: i32) -> (i32, i32) {
    %c0_i32 = arith.constant 0 : i32
    %c0_i32_0 = arith.constant 0 : i32
    return %arg0, %c0_i32 : i32, i32
  }
}

</mosaic_0001>

<llo_original>
// kernel: tpu_custom_call.1
$region0: #{tpu_custom_call.1}
  #allocation0 [shape = 'u32[]', space=smem, size = 0x4, offset = 0x4, fixed_abs, tag = 'smem constant byte address 0x4 - core index']
  #allocation1 [shape = 'u32[144,128]{1,0:T(1,128)}', space=vmem, size = 0x12000, scoped, tag = 'internal scratch']
  %s0 = inlined_call_operand.vmem [shape: f32[8,32], index: 0, kind: input, shape index: {}]
  %s1 = inlined_call_operand.vmem [shape: f32[8,16], index: 1, kind: input, shape index: {}]
  %s2 = inlined_call_operand.vmem [shape: bf16[32,64], index: 2, kind: input, shape index: {}]
  %s3 = inlined_call_operand.hbm [shape: bf16[16,64], index: 3, kind: input, shape index: {}]
  %s4 = inlined_call_operand.vmem [shape: f32[1,64], index: 4, kind: input, shape index: {}]
  %s5 = inlined_call_operand.vmem [shape: bf16[64,32], index: 5, kind: input, shape index: {}]
  %s6 = inlined_call_operand.vmem [shape: f32[1,32], index: 6, kind: input, shape index: {}]
  %s7 = inlined_call_operand.vmem [shape: bf16[32,32], index: 7, kind: input, shape index: {}]
  %s8 = inlined_call_operand.vmem [shape: f32[1,32], index: 8, kind: input, shape index: {}]
  %s9 = inlined_call_operand.hbm [shape: f32[8,32], index: 9, kind: output, shape index: {}]
  %s10 = sld [smem:[#allocation0]]
  $region50: #{tpu_custom_call.1} parent=0
    _
  %s12 = ssub.s32 1, %s10
  %s13 = scalar_select 0, %s12, %s10
  $region1: #{tpu_custom_call.1} parent=0
    #allocation2 [shape = 'u8[4096]{0}', space=vmem, size = 0x1000, scoped, tag = 'input window, operand 3, single buffered']
    #allocation3 [shape = 's32[1]{0}', space=sflag, size = 0x4, scoped, tag = 'scoped memory for tpu_custom_call.1']
    #allocation4 [shape = 's32[1]{0}', space=sflag, size = 0x4, scoped, tag = 'scoped memory for tpu_custom_call.1']
    #allocation5 [shape = 'u8[4096]{0}', space=vmem, size = 0x1000, scoped, tag = 'output window, operand 0, single buffered']
    %14 = vsyncpa [#allocation3], 0
    %15 = vsyncpa [#allocation4], 0
    // Predicated region
    $region2: #{tpu_custom_call.1} parent=1 // pred_check
      _
    $region3: #{tpu_custom_call.1} parent=1 // pred_check_branch
      %17 = sbr.rel (0) target = $region5
    $region4: #{tpu_custom_call.1} parent=1 // pred_region
      _
    $region5: #{tpu_custom_call.1} parent=1 // pred_fallthru
      _
    // Predicated region
    $region6: #{tpu_custom_call.1} parent=1 // pred_check
      _
    $region7: #{tpu_custom_call.1} parent=1 // pred_check_branch
      %19 = sbr.rel (0) target = $region9
    $region8: #{tpu_custom_call.1} parent=1 // pred_region
      _
    $region9: #{tpu_custom_call.1} parent=1 // pred_fallthru
      _
    // Predicated region
    $region10: #{tpu_custom_call.1} parent=1 // pred_check
      _
    $region11: #{tpu_custom_call.1} parent=1 // pred_check_branch
      %21 = sbr.rel (0) target = $region13
    $region12: #{tpu_custom_call.1} parent=1 // pred_region
      _
    $region13: #{tpu_custom_call.1} parent=1 // pred_fallthru
      _
    // Predicated region
    $region14: #{tpu_custom_call.1} parent=1 // pred_check
      _
    $region15: #{tpu_custom_call.1} parent=1 // pred_check_branch
      %23 = sbr.rel (0) target = $region17
    $region16: #{tpu_custom_call.1} parent=1 // pred_region
      %s25 = ssub.s32 128, 128
      %26 = vsyncadd [#allocation3], %s25
      %s27 = sshll.u32 [#allocation2], 4
      %s28 = int_to_ptr.vmem [resolvable:$true] %s27
      %33 = dma.hbm_to_vmem [thread:$0]  %s3, 128, %s28, [#allocation3], 64, 64, 4
    $region17: #{tpu_custom_call.1} parent=1 // pred_fallthru
      _
    // Predicated region
    $region18: #{tpu_custom_call.1} parent=1 // pred_check
      _
    $region19: #{tpu_custom_call.1} parent=1 // pred_check_branch
      %35 = sbr.rel (0) target = $region21
    $region20: #{tpu_custom_call.1} parent=1 // pred_region
      _
    $region21: #{tpu_custom_call.1} parent=1 // pred_fallthru
      _
    // Predicated region
    $region22: #{tpu_custom_call.1} parent=1 // pred_check
      _
    $region23: #{tpu_custom_call.1} parent=1 // pred_check_branch
      %37 = sbr.rel (0) target = $region25
    $region24: #{tpu_custom_call.1} parent=1 // pred_region
      _
    $region25: #{tpu_custom_call.1} parent=1 // pred_fallthru
      _
    // Predicated region
    $region26: #{tpu_custom_call.1} parent=1 // pred_check
      _
    $region27: #{tpu_custom_call.1} parent=1 // pred_check_branch
      %39 = sbr.rel (0) target = $region29
    $region28: #{tpu_custom_call.1} parent=1 // pred_region
      _
    $region29: #{tpu_custom_call.1} parent=1 // pred_fallthru
      _
    // Predicated region
    $region30: #{tpu_custom_call.1} parent=1 // pred_check
      _
    $region31: #{tpu_custom_call.1} parent=1 // pred_check_branch
      %41 = sbr.rel (0) target = $region33
    $region32: #{tpu_custom_call.1} parent=1 // pred_region
      _
    $region33: #{tpu_custom_call.1} parent=1 // pred_fallthru
      _
    // Predicated region
    $region34: #{tpu_custom_call.1} parent=1 // pred_check
      _
    $region35: #{tpu_custom_call.1} parent=1 // pred_check_branch
      %43 = sbr.rel (0) target = $region37
    $region36: #{tpu_custom_call.1} parent=1 // pred_region
      _
    $region37: #{tpu_custom_call.1} parent=1 // pred_fallthru
      _
    // Predicated region
    $region38: #{tpu_custom_call.1} parent=1 // pred_check
      _
    $region39: #{tpu_custom_call.1} parent=1 // pred_check_branch
      %45 = sbr.rel (0) target = $region41
    $region40: #{tpu_custom_call.1} parent=1 // pred_region
      %46 = dma.done [#allocation3], 128
    $region41: #{tpu_custom_call.1} parent=1 // pred_fallthru
      _
    %v48 = vld [vmem:[%s0] sm:$0xff]
    %v49 = vpack.c.bf16 %v48, %v48
    %v50 = vld [vmem:[%s2] sm:$0xf]
    %v51 = vld [vmem:[%s2 + $0x4] sm:$0xf]
    %v52 = vld [vmem:[%s2 + $0x8] sm:$0xf]
    %v53 = vld [vmem:[%s2 + $0xc] sm:$0xf]
    %v54 = vld [vmem:[%s1] sm:$0xff]
    %v55 = vpack.c.bf16 %v54, %v54
    %v56 = vld [vmem:[#allocation2] sm:$0xf]
    %v57 = vld [vmem:[#allocation2 + $0x4] sm:$0xf]
    %v60 = vunpack.c.l.b16 %v56
    %v61 = vunpack.c.l.b16 %v57
    %v62 = vpack.c.b16 %v61, %v60
    %vm64 = vcmask 130048
    %v66 = vsel %vm64, %v55, 0
    %68 = vmatprep.subr.bf16.mxu0 0
    %69 = vmatpush1.bf16.msra.mxu0 %v62
    %70 = vmatprep.subr.bf16.mxu0 0
    %71 = vmatpush1.bf16.msra.mxu0 0
    %72 = vmatprep.subr.bf16.mxu0 0
    %73 = vmatpush1.bf16.msra.mxu0 0
    %74 = vmatprep.subr.bf16.mxu0 0
    %75 = vmatpush1.bf16.msra.mxu0 0
    %76 = vmatprep.subr.bf16.mxu0 0
    %77 = vmatpush1.bf16.msra.mxu0 0
    %78 = vmatprep.subr.bf16.mxu0 0
    %79 = vmatpush1.bf16.msra.mxu0 0
    %80 = vmatprep.subr.bf16.mxu0 0
    %81 = vmatpush1.bf16.msra.mxu0 0
    %82 = vmatprep.subr.bf16.mxu0 0
    %83 = vmatpush1.bf16.msra.mxu0 0
    %84 = vmatprep.subr.bf16.mxu0 0
    %85 = vmatpush1.bf16.msra.mxu0 0
    %86 = vmatprep.subr.bf16.mxu0 0
    %87 = vmatpush1.bf16.msra.mxu0 0
    %88 = vmatprep.subr.bf16.mxu0 0
    %89 = vmatpush1.bf16.msra.mxu0 0
    %90 = vmatprep.subr.bf16.mxu0 0
    %91 = vmatpush1.bf16.msra.mxu0 0
    %92 = vmatprep.subr.bf16.mxu0 0
    %93 = vmatpush1.bf16.msra.mxu0 0
    %94 = vmatprep.subr.bf16.mxu0 0
    %95 = vmatpush1.bf16.msra.mxu0 0
    %96 = vmatprep.subr.bf16.mxu0 0
    %97 = vmatpush1.bf16.msra.mxu0 0
    %98 = vmatprep.subr.bf16.mxu0 0
    %99 = vmatpush1.bf16.msra.mxu0 0
    %100 = vmatprep.mubr.bf16.mxu0 0
    %101 = vmatmul.mubr.bf16.gmra.mrb[0].mxu0 %v66
    %v102 = vpop.f32.mrb[0].mxu0
    %v103 = vadd.f32 0.0, %v102
    %v104 = vpop.f32.mrb[0].mxu0
    %v105 = vpop.f32.mrb[0].mxu0
    %v106 = vpop.f32.mrb[0].mxu0
    %107 = vdwg.mxu0
    %v112 = vunpack.c.l.b16 %v50
    %v113 = vunpack.c.l.b16 %v51
    %v114 = vunpack.c.l.b16 %v52
    %v115 = vunpack.c.l.b16 %v53
    %v116 = vpack.c.b16 %v113, %v112
    %v117 = vpack.c.b16 %v115, %v114
    %vm120 = vcmask 261120
    %v122 = vsel %vm120, %v49, 0
    %124 = vmatprep.subr.bf16.mxu0 0
    %125 = vmatpush1.bf16.msra.mxu0 %v116
    %126 = vmatprep.subr.bf16.mxu0 0
    %127 = vmatpush1.bf16.msra.mxu0 %v117
    %128 = vmatprep.subr.bf16.mxu0 0
    %129 = vmatpush1.bf16.msra.mxu0 0
    %130 = vmatprep.subr.bf16.mxu0 0
    %131 = vmatpush1.bf16.msra.mxu0 0
    %132 = vmatprep.subr.bf16.mxu0 0
    %133 = vmatpush1.bf16.msra.mxu0 0
    %134 = vmatprep.subr.bf16.mxu0 0
    %135 = vmatpush1.bf16.msra.mxu0 0
    %136 = vmatprep.subr.bf16.mxu0 0
    %137 = vmatpush1.bf16.msra.mxu0 0
    %138 = vmatprep.subr.bf16.mxu0 0
    %139 = vmatpush1.bf16.msra.mxu0 0
    %140 = vmatprep.subr.bf16.mxu0 0
    %141 = vmatpush1.bf16.msra.mxu0 0
    %142 = vmatprep.subr.bf16.mxu0 0
    %143 = vmatpush1.bf16.msra.mxu0 0
    %144 = vmatprep.subr.bf16.mxu0 0
    %145 = vmatpush1.bf16.msra.mxu0 0
    %146 = vmatprep.subr.bf16.mxu0 0
    %147 = vmatpush1.bf16.msra.mxu0 0
    %148 = vmatprep.subr.bf16.mxu0 0
    %149 = vmatpush1.bf16.msra.mxu0 0
    %150 = vmatprep.subr.bf16.mxu0 0
    %151 = vmatpush1.bf16.msra.mxu0 0
    %152 = vmatprep.subr.bf16.mxu0 0
    %153 = vmatpush1.bf16.msra.mxu0 0
    %154 = vmatprep.subr.bf16.mxu0 0
    %155 = vmatpush1.bf16.msra.mxu0 0
    %156 = vmatprep.mubr.bf16.mxu0 0
    %157 = vmatmul.mubr.bf16.gmra.mrb[0].mxu0 %v122
    %v158 = vpop.f32.mrb[0].mxu0
    %v159 = vadd.f32 %v103, %v158
    %v160 = vpop.f32.mrb[0].mxu0
    %v161 = vpop.f32.mrb[0].mxu0
    %v162 = vpop.f32.mrb[0].mxu0
    %163 = vdwg.mxu0
    %v164 = vld [vmem:[%s4] sm:$0x1]
    %v166 = vlaneseq
    %v167 = vshrl.u32 %v166, 7
    %v168 = vsub.s32 0, %v167
    %v169 = vrot.slane %v164, %v168
    %v171 = vadd.f32 %v159, %v169
    %vm172 = vcmp.gt.f32.partialorder %v171, 0.0
    %v173 = vmul.f32 %v171, 0.2
    %v174 = vsel %vm172, %v171, %v173
    %v175 = vpack.c.bf16 %v174, %v174
    %v176 = vld [vmem:[%s5] sm:$0xf]
    %v177 = vld [vmem:[%s5 + $0x4] sm:$0xf]
    %v178 = vld [vmem:[%s5 + $0x8] sm:$0xf]
    %v179 = vld [vmem:[%s5 + $0xc] sm:$0xf]
    %v180 = vld [vmem:[%s5 + $0x10] sm:$0xf]
    %v181 = vld [vmem:[%s5 + $0x14] sm:$0xf]
    %v182 = vld [vmem:[%s5 + $0x18] sm:$0xf]
    %v183 = vld [vmem:[%s5 + $0x1c] sm:$0xf]
    %v184 = vld [vmem:[%s6] sm:$0x1]
    %v186 = vlaneseq
    %v187 = vshrl.u32 %v186, 7
    %v188 = vsub.s32 0, %v187
    %v189 = vrot.slane %v184, %v188
    %v199 = vunpack.c.l.b16 %v176
    %v200 = vunpack.c.l.b16 %v177
    %v201 = vunpack.c.l.b16 %v178
    %v202 = vunpack.c.l.b16 %v179
    %v203 = vunpack.c.l.b16 %v180
    %v204 = vunpack.c.l.b16 %v181
    %v205 = vunpack.c.l.b16 %v182
    %v206 = vunpack.c.l.b16 %v183
    %v207 = vpack.c.b16 %v200, %v199
    %v208 = vpack.c.b16 %v202, %v201
    %v209 = vpack.c.b16 %v204, %v203
    %v210 = vpack.c.b16 %v206, %v205
    %vm215 = vcmask 523264
    %v217 = vsel %vm215, %v175, 0
    %219 = vmatprep.subr.bf16.mxu0 0
    %220 = vmatpush1.bf16.msra.mxu0 %v207
    %221 = vmatprep.subr.bf16.mxu0 0
    %222 = vmatpush1.bf16.msra.mxu0 %v208
    %223 = vmatprep.subr.bf16.mxu0 0
    %224 = vmatpush1.bf16.msra.mxu0 %v209
    %225 = vmatprep.subr.bf16.mxu0 0
    %226 = vmatpush1.bf16.msra.mxu0 %v210
    %227 = vmatprep.subr.bf16.mxu0 0
    %228 = vmatpush1.bf16.msra.mxu0 0
    %229 = vmatprep.subr.bf16.mxu0 0
    %230 = vmatpush1.bf16.msra.mxu0 0
    %231 = vmatprep.subr.bf16.mxu0 0
    %232 = vmatpush1.bf16.msra.mxu0 0
    %233 = vmatprep.subr.bf16.mxu0 0
    %234 = vmatpush1.bf16.msra.mxu0 0
    %235 = vmatprep.subr.bf16.mxu0 0
    %236 = vmatpush1.bf16.msra.mxu0 0
    %237 = vmatprep.subr.bf16.mxu0 0
    %238 = vmatpush1.bf16.msra.mxu0 0
    %239 = vmatprep.subr.bf16.mxu0 0
    %240 = vmatpush1.bf16.msra.mxu0 0
    %241 = vmatprep.subr.bf16.mxu0 0
    %242 = vmatpush1.bf16.msra.mxu0 0
    %243 = vmatprep.subr.bf16.mxu0 0
    %244 = vmatpush1.bf16.msra.mxu0 0
    %245 = vmatprep.subr.bf16.mxu0 0
    %246 = vmatpush1.bf16.msra.mxu0 0
    %247 = vmatprep.subr.bf16.mxu0 0
    %248 = vmatpush1.bf16.msra.mxu0 0
    %249 = vmatprep.subr.bf16.mxu0 0
    %250 = vmatpush1.bf16.msra.mxu0 0
    %251 = vmatprep.mubr.bf16.mxu0 0
    %252 = vmatmul.mubr.bf16.gmra.mrb[0].mxu0 %v217
    %v253 = vpop.f32.mrb[0].mxu0
    %v254 = vadd.f32 %v189, %v253
    %v255 = vpop.f32.mrb[0].mxu0
    %v256 = vpop.f32.mrb[0].mxu0
    %v257 = vpop.f32.mrb[0].mxu0
    %258 = vdwg.mxu0
    %vm259 = vcmp.gt.f32.partialorder %v254, 0.0
    %v260 = vmul.f32 %v254, 0.2
    %v261 = vsel %vm259, %v254, %v260
    %v262 = vpack.c.bf16 %v261, %v261
    %v263 = vld [vmem:[%s7] sm:$0xf]
    %v264 = vld [vmem:[%s7 + $0x4] sm:$0xf]
    %v265 = vld [vmem:[%s7 + $0x8] sm:$0xf]
    %v266 = vld [vmem:[%s7 + $0xc] sm:$0xf]
    %v267 = vld [vmem:[%s8] sm:$0x1]
    %v269 = vlaneseq
    %v270 = vshrl.u32 %v269, 7
    %v271 = vsub.s32 0, %v270
    %v272 = vrot.slane %v267, %v271
    %v278 = vunpack.c.l.b16 %v263
    %v279 = vunpack.c.l.b16 %v264
    %v280 = vunpack.c.l.b16 %v265
    %v281 = vunpack.c.l.b16 %v266
    %v282 = vpack.c.b16 %v279, %v278
    %v283 = vpack.c.b16 %v281, %v280
    %v287 = vsel %vm120, %v262, 0
    %289 = vmatprep.subr.bf16.mxu0 0
    %290 = vmatpush1.bf16.msra.mxu0 %v282
    %291 = vmatprep.subr.bf16.mxu0 0
    %292 = vmatpush1.bf16.msra.mxu0 %v283
    %293 = vmatprep.subr.bf16.mxu0 0
    %294 = vmatpush1.bf16.msra.mxu0 0
    %295 = vmatprep.subr.bf16.mxu0 0
    %296 = vmatpush1.bf16.msra.mxu0 0
    %297 = vmatprep.subr.bf16.mxu0 0
    %298 = vmatpush1.bf16.msra.mxu0 0
    %299 = vmatprep.subr.bf16.mxu0 0
    %300 = vmatpush1.bf16.msra.mxu0 0
    %301 = vmatprep.subr.bf16.mxu0 0
    %302 = vmatpush1.bf16.msra.mxu0 0
    %303 = vmatprep.subr.bf16.mxu0 0
    %304 = vmatpush1.bf16.msra.mxu0 0
    %305 = vmatprep.subr.bf16.mxu0 0
    %306 = vmatpush1.bf16.msra.mxu0 0
    %307 = vmatprep.subr.bf16.mxu0 0
    %308 = vmatpush1.bf16.msra.mxu0 0
    %309 = vmatprep.subr.bf16.mxu0 0
    %310 = vmatpush1.bf16.msra.mxu0 0
    %311 = vmatprep.subr.bf16.mxu0 0
    %312 = vmatpush1.bf16.msra.mxu0 0
    %313 = vmatprep.subr.bf16.mxu0 0
    %314 = vmatpush1.bf16.msra.mxu0 0
    %315 = vmatprep.subr.bf16.mxu0 0
    %316 = vmatpush1.bf16.msra.mxu0 0
    %317 = vmatprep.subr.bf16.mxu0 0
    %318 = vmatpush1.bf16.msra.mxu0 0
    %319 = vmatprep.subr.bf16.mxu0 0
    %320 = vmatpush1.bf16.msra.mxu0 0
    %321 = vmatprep.mubr.bf16.mxu0 0
    %322 = vmatmul.mubr.bf16.gmra.mrb[0].mxu0 %v287
    %v323 = vpop.f32.mrb[0].mxu0
    %v324 = vadd.f32 %v272, %v323
    %v325 = vpop.f32.mrb[0].mxu0
    %v326 = vpop.f32.mrb[0].mxu0
    %v327 = vpop.f32.mrb[0].mxu0
    %328 = vdwg.mxu0
    %329 = vst.msk [vmem:[#allocation5] sm:$0xff] %vm120, %v324
    // Predicated region
    $region42: #{tpu_custom_call.1} parent=1 // pred_check
      _
    $region43: #{tpu_custom_call.1} parent=1 // pred_check_branch
      %331 = sbr.rel (0) target = $region45
    $region44: #{tpu_custom_call.1} parent=1 // pred_region
      %s333 = ssub.s32 128, 128
      %334 = vsyncadd [#allocation4], %s333
      %s336 = sshll.u32 [#allocation5], 4
      %s337 = int_to_ptr.vmem [resolvable:$true] %s336
      %339 = dma.vmem_to_hbm [thread:$0]  %s337, 128, %s9, [#allocation4]
    $region45: #{tpu_custom_call.1} parent=1 // pred_fallthru
      _
    // Predicated region
    $region46: #{tpu_custom_call.1} parent=1 // pred_check
      _
    $region47: #{tpu_custom_call.1} parent=1 // pred_check_branch
      %341 = sbr.rel (0) target = $region49
    $region48: #{tpu_custom_call.1} parent=1 // pred_region
      %342 = dma.done [#allocation4], 128
    $region49: #{tpu_custom_call.1} parent=1 // pred_fallthru
      _
    %343 = vsyncpa [#allocation3], 1
    %344 = vsyncpa [#allocation4], 1

</llo_original>
